<compile_context>
chip_gen: v6e
topology: v6e:2x2x1
jax: 0.10.0
libtpu: 0.0.40
codegen_flags: <defaults>
</compile_context>

<pallas_src>
import functools
import math

import jax
import jax.numpy as jnp
from jax.experimental import pallas as pl
from jax.experimental.pallas import tpu as pltpu


def _ecanet_kernel(w_ref, x_ref, o_ref, *, k, pad, inv_len):
    # w_ref: (k,) f32 conv taps in SMEM (scalar prefetch)
    # x_ref: (B_TILE, C, L) input block, L on the lane axis
    # o_ref: (B_TILE, C, L) output block
    x = x_ref[...]                                              # input dtype
    c = x.shape[1]

    # Global average pool over L, accumulated in f32 (cross-lane reduce / XLU).
    gap = jnp.sum(x, axis=-1, dtype=jnp.float32) * inv_len      # (B, C) f32

    # Build the SAME-padded k-tap channel-conv matrix from the SMEM taps:
    #   M[c_in, c_out] = w[c_in - c_out + pad]   (0 outside the band)
    # so  z = gap @ M  reproduces the zero-padded cross-correlation over C.
    c_in = jax.lax.broadcasted_iota(jnp.int32, (c, c), 0)
    c_out = jax.lax.broadcasted_iota(jnp.int32, (c, c), 1)
    tap = c_in - c_out + pad
    m = jnp.zeros((c, c), jnp.float32)
    for t in range(k):                                          # k is tiny/static
        m = m + jnp.where(tap == t, w_ref[t], 0.0)

    # Channel conv as one small (B, C) @ (C, C) MXU matmul.
    z = jnp.dot(gap, m, preferred_element_type=jnp.float32)     # (B, C) f32

    # Exact sigmoid (only B*C values; exp goes to the EUP anyway).
    attn = 1.0 / (1.0 + jnp.exp(-z))                            # (B, C) f32

    # Per-channel rescale in the INPUT dtype -> lane-dense, unmasked store.
    o_ref[...] = x * attn[:, :, None].astype(x.dtype)


def _round_up(v, m):
    return ((v + m - 1) // m) * m


def _pick_batch_tile(n, c, l, itemsize, target_bytes):
    """Largest divisor of n whose block is <= target_bytes, keeping >=2 steps."""
    per_row = c * l * itemsize
    cap = max(1, target_bytes // max(per_row, 1))
    if n >= 2:
        cap = min(cap, n // 2)      # keep the grid >= 2 steps (v7x dual TC)
    best = 1
    for d in range(1, int(cap) + 1):
        if n % d == 0:
            best = d
    return best


def ecanet_pallas(x, conv_w, *, block_target_bytes=2 * 1024 * 1024):
    """x: (N, C, L) activations; conv_w: (k,) Conv1d taps (no bias)."""
    n, c, l = x.shape
    k = int(conv_w.shape[0])
    pad = (k - 1) // 2

    # Alignment: L multiple of 128 (lanes), C multiple of the sublane tile.
    sublane = {4: 8, 2: 16, 1: 32}.get(x.dtype.itemsize, 8)
    l_pad = _round_up(l, 128)
    c_pad = _round_up(c, sublane)
    xp = x
    if (l_pad, c_pad) != (l, c):
        # Zero padding is exact: padded L adds 0 to the GAP sum (we divide by
        # the true L) and padded channels have gap==0, matching the conv's
        # zero boundary padding.
        xp = jnp.pad(x, ((0, 0), (0, c_pad - c), (0, l_pad - l)))

    b_tile = _pick_batch_tile(n, c_pad, l_pad, xp.dtype.itemsize,
                              block_target_bytes)
    grid = (n // b_tile,)

    block_bytes = b_tile * c_pad * l_pad * xp.dtype.itemsize
    # double-buffered in + out blocks, in-kernel (C, C) f32 temp, small slack
    vmem_needed = 4 * block_bytes + 4 * c_pad * c_pad + (2 << 20)
    vmem_limit = int(max(vmem_needed, 32 * 1024 * 1024))

    kernel = functools.partial(_ecanet_kernel, k=k, pad=pad, inv_len=1.0 / l)

    out = pl.pallas_call(
        kernel,
        out_shape=jax.ShapeDtypeStruct((n, c_pad, l_pad), x.dtype),
        grid_spec=pltpu.PrefetchScalarGridSpec(
            num_scalar_prefetch=1,                    # conv taps -> SMEM
            grid=grid,
            in_specs=[
                pl.BlockSpec((b_tile, c_pad, l_pad), lambda i, w: (i, 0, 0)),
            ],
            out_specs=pl.BlockSpec((b_tile, c_pad, l_pad),
                                   lambda i, w: (i, 0, 0)),
        ),
        compiler_params=pltpu.CompilerParams(
            dimension_semantics=("parallel",),
            vmem_limit_bytes=vmem_limit),
    )(conv_w.astype(jnp.float32), xp)

    if (l_pad, c_pad) != (l, c):
        out = out[:, :c, :l]
    return out


# ---------------------------------------------------------------------------
# Pure-JAX reference (mirrors the PyTorch forward exactly).
# ---------------------------------------------------------------------------
def ecanet_ref(x, conv_w):
    k = conv_w.shape[0]
    pad = (k - 1) // 2
    gap = jnp.mean(x, axis=-1)                                   # (N, C)
    z = jax.lax.conv_general_dilated(
        gap[:, None, :].astype(jnp.float32),
        conv_w[None, None, :].astype(jnp.float32),
        window_strides=(1,), padding=[(pad, pad)],
        dimension_numbers=("NCH", "OIH", "NCH"))[:, 0, :]        # (N, C)
    attn = jax.nn.sigmoid(z)
    return x * attn[:, :, None]


if __name__ == "__main__":
    # Module config: ECANet(in_channels=64, gamma=2, b=1) on x of shape (N, C, L).
    N, C, L = 2, 64, 128
    gamma, b = 2, 1

    # Same kernel-size rule as the PyTorch module.
    ksize = int(abs((math.log(C, 2) + b) / gamma))
    ksize = ksize if ksize % 2 else ksize + 1

    key = jax.random.PRNGKey(0)
    kx, kw = jax.random.split(key)
    x = jax.random.normal(kx, (N, C, L), jnp.float32)
    conv_w = 0.3 * jax.random.normal(kw, (ksize,), jnp.float32)

    out = ecanet_pallas(x, conv_w)
    out = jax.block_until_ready(out)

    ref = ecanet_ref(x, conv_w)
    assert out.shape == (N, C, L)
    max_err = float(jnp.max(jnp.abs(out - ref)))
    assert jnp.allclose(out, ref, atol=1e-4, rtol=1e-4), max_err

    print("KERNEL_OK")
</pallas_src>

<mosaic_0001>
module attributes {stable_mosaic.version = 11 : i64} {
  func.func @_ecanet_kernel(%arg0: i32, %arg1: memref<3xf32, #tpu.memory_space<smem>>, %arg2: memref<1x64x128xf32, #tpu.memory_space<vmem>>, %arg3: memref<1x64x128xf32, #tpu.memory_space<vmem>>) attributes {dimension_semantics = [#tpu.dimension_semantics<parallel>], iteration_bounds = array<i64: 2>, scalar_prefetch = 1 : i64, scratch_operands = 0 : i64, tpu.core_type = #tpu.core_type<tc>, window_params = [{transform_indices = @transform_0, window_bounds = array<i64: 1, 64, 128>}, {transform_indices = @transform_1, window_bounds = array<i64: 1, 64, 128>}]} {
    %c0 = arith.constant 0 : index
    %c0_0 = arith.constant 0 : index
    %c0_1 = arith.constant 0 : index
    %0 = vector.load %arg2[%c0, %c0_0, %c0_1] : memref<1x64x128xf32, #tpu.memory_space<vmem>>, vector<1x64x128xf32>
    %cst = arith.constant dense<0.000000e+00> : vector<1x64xf32>
    %1 = vector.multi_reduction <add>, %0, %cst [2] : vector<1x64x128xf32> to vector<1x64xf32>
    %cst_2 = arith.constant 7.812500e-03 : f32
    %2 = vector.broadcast %cst_2 : f32 to vector<1x64xf32>
    %3 = arith.mulf %1, %2 : vector<1x64xf32>
    %4 = tpu.iota {dimensions = array<i32: 0>} : vector<64x64xi32>
    %5 = tpu.iota {dimensions = array<i32: 1>} : vector<64x64xi32>
    %6 = arith.subi %4, %5 : vector<64x64xi32>
    %c1_i32 = arith.constant 1 : i32
    %7 = vector.broadcast %c1_i32 : i32 to vector<64x64xi32>
    %8 = arith.addi %6, %7 : vector<64x64xi32>
    %cst_3 = arith.constant 0.000000e+00 : f32
    %9 = vector.broadcast %cst_3 : f32 to vector<64x64xf32>
    %c0_i32 = arith.constant 0 : i32
    %10 = vector.broadcast %c0_i32 : i32 to vector<64x64xi32>
    %11 = arith.cmpi eq, %8, %10 : vector<64x64xi32>
    %c0_4 = arith.constant 0 : index
    %12 = memref.load %arg1[%c0_4] : memref<3xf32, #tpu.memory_space<smem>>
    %cst_5 = arith.constant 0.000000e+00 : f32
    %13 = vector.broadcast %12 : f32 to vector<64x64xf32>
    %14 = vector.broadcast %cst_5 : f32 to vector<64x64xf32>
    %15 = arith.select %11, %13, %14 : vector<64x64xi1>, vector<64x64xf32>
    %16 = arith.addf %9, %15 : vector<64x64xf32>
    %c1_i32_6 = arith.constant 1 : i32
    %17 = vector.broadcast %c1_i32_6 : i32 to vector<64x64xi32>
    %18 = arith.cmpi eq, %8, %17 : vector<64x64xi32>
    %c1 = arith.constant 1 : index
    %19 = memref.load %arg1[%c1] : memref<3xf32, #tpu.memory_space<smem>>
    %cst_7 = arith.constant 0.000000e+00 : f32
    %20 = vector.broadcast %19 : f32 to vector<64x64xf32>
    %21 = vector.broadcast %cst_7 : f32 to vector<64x64xf32>
    %22 = arith.select %18, %20, %21 : vector<64x64xi1>, vector<64x64xf32>
    %23 = arith.addf %16, %22 : vector<64x64xf32>
    %c2_i32 = arith.constant 2 : i32
    %24 = vector.broadcast %c2_i32 : i32 to vector<64x64xi32>
    %25 = arith.cmpi eq, %8, %24 : vector<64x64xi32>
    %c2 = arith.constant 2 : index
    %26 = memref.load %arg1[%c2] : memref<3xf32, #tpu.memory_space<smem>>
    %cst_8 = arith.constant 0.000000e+00 : f32
    %27 = vector.broadcast %26 : f32 to vector<64x64xf32>
    %28 = vector.broadcast %cst_8 : f32 to vector<64x64xf32>
    %29 = arith.select %25, %27, %28 : vector<64x64xi1>, vector<64x64xf32>
    %30 = arith.addf %23, %29 : vector<64x64xf32>
    %cst_9 = arith.constant dense<0.000000e+00> : vector<1x64xf32>
    %31 = tpu.matmul %3, %30, %cst_9 {dimension_numbers = #tpu.dot_dimension_numbers<[1], [0], [0], [1], [0, 0, 1, 1], [], []>} : vector<1x64xf32>, vector<64x64xf32>, vector<1x64xf32> -> vector<1x64xf32>
    %cst_10 = arith.constant 0.000000e+00 : f32
    %32 = vector.broadcast %cst_10 : f32 to vector<1x64xf32>
    %33 = arith.subf %32, %31 : vector<1x64xf32>
    %34 = math.exp %33 : vector<1x64xf32>
    %cst_11 = arith.constant 1.000000e+00 : f32
    %35 = vector.broadcast %cst_11 : f32 to vector<1x64xf32>
    %36 = arith.addf %35, %34 : vector<1x64xf32>
    %cst_12 = arith.constant 1.000000e+00 : f32
    %37 = vector.broadcast %cst_12 : f32 to vector<1x64xf32>
    %38 = arith.divf %37, %36 : vector<1x64xf32>
    %39 = vector.shape_cast %38 : vector<1x64xf32> to vector<1x64x1xf32>
    %40 = vector.broadcast %39 : vector<1x64x1xf32> to vector<1x64x128xf32>
    %41 = arith.mulf %0, %40 : vector<1x64x128xf32>
    %c0_13 = arith.constant 0 : index
    %c0_14 = arith.constant 0 : index
    %c0_15 = arith.constant 0 : index
    %42 = vector.load %arg3[%c0_13, %c0_14, %c0_15] : memref<1x64x128xf32, #tpu.memory_space<vmem>>, vector<1x64x128xf32>
    tpu.vector_store %arg3[%c0_13, %c0_14, %c0_15], %41 {strides = array<i32>} : memref<1x64x128xf32, #tpu.memory_space<vmem>>, vector<1x64x128xf32>,
    return
  }
  func.func @transform_0(%arg0: i32, %arg1: memref<3xf32, #tpu.memory_space<smem>>) -> (i32, i32, i32) {
    %c0_i32 = arith.constant 0 : i32
    %c0_i32_0 = arith.constant 0 : i32
    %c0_i32_1 = arith.constant 0 : i32
    return %arg0, %c0_i32, %c0_i32_0 : i32, i32, i32
  }
  func.func @transform_1(%arg0: i32, %arg1: memref<3xf32, #tpu.memory_space<smem>>) -> (i32, i32, i32) {
    %c0_i32 = arith.constant 0 : i32
    %c0_i32_0 = arith.constant 0 : i32
    %c0_i32_1 = arith.constant 0 : i32
    return %arg0, %c0_i32, %c0_i32_0 : i32, i32, i32
  }
}

</mosaic_0001>

<llo_original>
// kernel: tpu_custom_call.1
$region0: #{tpu_custom_call.1}
  #allocation0 [shape = 'u32[]', space=smem, size = 0x4, offset = 0x4, fixed_abs, tag = 'smem constant byte address 0x4 - core index']
  #allocation1 [shape = 'u32[144,128]{1,0:T(1,128)}', space=vmem, size = 0x12000, scoped, tag = 'internal scratch']
  #allocation2 [shape = 's32[1]{0}', space=sflag, size = 0x4, scoped, tag = 'scoped memory for tpu_custom_call.1']
  #allocation3 [shape = 'u8[512]{0}', space=smem, size = 0x200, scoped, tag = 'prefetched SMEM operand 0']
  %s0 = inlined_call_operand.hbm [shape: f32[3], index: 0, kind: input, shape index: {}]
  %s1 = inlined_call_operand.hbm [shape: f32[2,64,128], index: 1, kind: input, shape index: {}]
  %s2 = inlined_call_operand.hbm [shape: f32[2,64,128], index: 2, kind: output, shape index: {}]
  %s3 = sld [smem:[#allocation0]]
  $region41: #{tpu_custom_call.1} parent=0
    _
  %s5 = ssub.s32 1, %s3
  %s6 = scalar_select 0, %s5, %s3
  %8 = dma.hbm_to_smem %s0, 16, [#allocation3], [#allocation2]
  %9 = dma.done [#allocation2], 16
  %10 = sfence
  $region1: #{tpu_custom_call.1} parent=0
    #allocation4 [shape = 'u8[65536]{0}', space=vmem, size = 0x10000, scoped, tag = 'input window, operand 1']
    #allocation5 [shape = 's32[2]{0}', space=sflag, size = 0x8, scoped, tag = 'scoped memory for tpu_custom_call.1']
    #allocation6 [shape = 's32[2]{0}', space=sflag, size = 0x8, scoped, tag = 'scoped memory for tpu_custom_call.1']
    #allocation7 [shape = 'u8[65536]{0}', space=vmem, size = 0x10000, scoped, tag = 'output window, operand 0']
    %11 = vsyncpa [#allocation5], 0
    %s12 = scalar_lea.sflag [#allocation5], 1
    %13 = vsyncpa %s12, 0
    %14 = vsyncpa [#allocation6], 0
    %s15 = scalar_lea.sflag [#allocation6], 1
    %16 = vsyncpa %s15, 0
    loop: start=0, step=1, limit=4
    $region2: #{tpu_custom_call.1} parent=1 // loop_pre_header
      _
    $region3: #{tpu_custom_call.1} parent=1 // loop_header
      %s18 = sphi 0, %s22
      %p19 = scmp.ge.s32.totalorder %s18, 4
      %s28 = sphi 0, %s30
      %s31 = sphi 0, %s28
      %s32 = sphi 0, %s31
      %s48 = sphi 0, %s32
      %s54 = sphi 0, %s56
      %s57 = sphi 0, %s54
      %s58 = sphi 0, %s57
      %s74 = sphi 0, %s58
    $region4: #{tpu_custom_call.1} parent=1 // loop_header_branch
      %21 = sbr.rel (%p19) target = $region8
    $region5: #{tpu_custom_call.1} parent=1 // loop_body
      %s23 = ssub.s32 %s18, 1
      %s24 = ssub.s32 %s18, 2
      %s25 = sadd.s32 %s18, 1
      %s26 = ssub.s32 %s18, %s25
      %p27 = scmp.eq.s32.totalorder %s26, 0
      %s29 = sadd.s32 %s28, 1
      %s30 = scalar_select %p27, %s28, %s29
      %p33 = pneg %p27
      %p34 = scmp.eq.s32.totalorder %s18, 1
      %p35 = por %p33, %p34
      %p36 = scmp.ne.s32.totalorder %s28, %s31
      %p37 = scmp.eq.s32.totalorder %s18, 0
      %p38 = por %p36, %p37
      %p39 = scmp.ne.s32.totalorder %s28, %s31
      %p40 = scmp.eq.s32.totalorder %s23, 1
      %p41 = por %p39, %p40
      %p42 = scmp.ne.s32.totalorder %s31, %s32
      %p43 = scmp.eq.s32.totalorder %s23, 0
      %p44 = por %p42, %p43
      %p45 = scmp.ne.s32.totalorder %s31, %s32
      %p46 = scmp.eq.s32.totalorder %s24, 1
      %p47 = por %p45, %p46
      %p49 = scmp.ne.s32.totalorder %s32, %s48
      %p50 = scmp.eq.s32.totalorder %s24, 0
      %p51 = por %p49, %p50
      %s52 = ssub.s32 %s18, %s25
      %p53 = scmp.eq.s32.totalorder %s52, 0
      %s55 = sadd.s32 %s54, 1
      %s56 = scalar_select %p53, %s54, %s55
      %p59 = pneg %p53
      %p60 = scmp.eq.s32.totalorder %s18, 1
      %p61 = por %p59, %p60
      %p62 = scmp.ne.s32.totalorder %s54, %s57
      %p63 = scmp.eq.s32.totalorder %s18, 0
      %p64 = por %p62, %p63
      %p65 = scmp.ne.s32.totalorder %s54, %s57
      %p66 = scmp.eq.s32.totalorder %s23, 1
      %p67 = por %p65, %p66
      %p68 = scmp.ne.s32.totalorder %s57, %s58
      %p69 = scmp.eq.s32.totalorder %s23, 0
      %p70 = por %p68, %p69
      %p71 = scmp.ne.s32.totalorder %s57, %s58
      %p72 = scmp.eq.s32.totalorder %s24, 1
      %p73 = por %p71, %p72
      %p75 = scmp.ne.s32.totalorder %s58, %s74
      %p76 = scmp.eq.s32.totalorder %s24, 0
      %p77 = por %p75, %p76
      %p78 = scmp.le.s32.totalorder 1, %s18
      %p79 = scmp.lt.s32.totalorder %s18, 3
      %p80 = pnand %p78, %p79
      %p81 = pneg %p80
      // Predicated region
      $region9: #{tpu_custom_call.1} parent=5 // pred_check
        _
      $region10: #{tpu_custom_call.1} parent=5 // pred_check_branch
        %83 = sbr.rel (%p80) target = $region12
      $region11: #{tpu_custom_call.1} parent=5 // pred_region
        %s84 = ssub.s32 %s18, 1
      $region12: #{tpu_custom_call.1} parent=5 // pred_fallthru
        _
      %p85 = scmp.lt.s32.totalorder %s18, 2
      // Predicated region
      $region13: #{tpu_custom_call.1} parent=5 // pred_check
        %p86 = pneg %p85
      $region14: #{tpu_custom_call.1} parent=5 // pred_check_branch
        %88 = sbr.rel (%p86) target = $region16
      $region15: #{tpu_custom_call.1} parent=5 // pred_region
        // Predicated region
        $region17: #{tpu_custom_call.1} parent=15 // pred_check
          %p89 = pneg %p38
        $region18: #{tpu_custom_call.1} parent=15 // pred_check_branch
          %91 = sbr.rel (%p89) target = $region20
        $region19: #{tpu_custom_call.1} parent=15 // pred_region
          %s92 = sand.u32 %s28, 1
          %s93 = scalar_lea.sflag [#allocation5], %s92
          %s94 = sand.u32 %s28, 1
          %s95 = smul.addr %s94, 64
          %s96 = scalar_lea.vmem [#allocation4], %s95
          %s98 = ssub.s32 1024, 1024
          %99 = vsyncadd %s93, %s98
          %s100 = smul.addr %s18, 8
          %s101 = smul.addr %s100, 128
          %s102 = scalar_lea.hbm %s1, %s101
          %s103 = sshll.u32 %s96, 4
          %s104 = int_to_ptr.vmem [resolvable:$true] %s103
          %109 = dma.hbm_to_vmem [thread:$0]  %s102, 1024, %s104, %s93, 128, 128, 8
        $region20: #{tpu_custom_call.1} parent=15 // pred_fallthru
          _
      $region16: #{tpu_custom_call.1} parent=5 // pred_fallthru
        _
      %p110 = scmp.le.s32.totalorder 1, %s18
      %p111 = scmp.lt.s32.totalorder %s18, 3
      %p112 = pnand %p110, %p111
      %p113 = pneg %p112
      // Predicated region
      $region21: #{tpu_custom_call.1} parent=5 // pred_check
        _
      $region22: #{tpu_custom_call.1} parent=5 // pred_check_branch
        %115 = sbr.rel (%p112) target = $region24
      $region23: #{tpu_custom_call.1} parent=5 // pred_region
        %s116 = ssub.s32 %s18, 1
        %s117 = sand.u32 %s31, 1
        %s118 = scalar_lea.sflag [#allocation5], %s117
        %s119 = sand.u32 %s31, 1
        %s120 = smul.addr %s119, 64
        %s121 = scalar_lea.vmem [#allocation4], %s120
        // Predicated region
        $region25: #{tpu_custom_call.1} parent=23 // pred_check
          %p122 = pneg %p44
        $region26: #{tpu_custom_call.1} parent=23 // pred_check_branch
          %124 = sbr.rel (%p122) target = $region28
        $region27: #{tpu_custom_call.1} parent=23 // pred_region
          %125 = dma.done %s118, 1024
        $region28: #{tpu_custom_call.1} parent=23 // pred_fallthru
          _
        %s126 = sand.u32 %s31, 1
        %s127 = scalar_lea.sflag [#allocation5], %s126
        %s128 = sand.u32 %s31, 1
        %s129 = smul.addr %s128, 64
        %s130 = scalar_lea.vmem [#allocation4], %s129
        %p131 = pneg %p44
        %p132 = pneg %p41
        %p133 = pneg %p70
        %p134 = pneg %p67
        %s135 = sand.u32 %s57, 1
        %s136 = scalar_lea.sflag [#allocation6], %s135
        %s137 = sand.u32 %s57, 1
        %s138 = smul.addr %s137, 64
        %s139 = scalar_lea.vmem [#allocation7], %s138
        %v140 = vld [vmem:[%s121] sm:$0xff]
        %v141 = vld [vmem:[%s121 + $0x8] sm:$0xff]
        %v142 = vld [vmem:[%s121 + $0x10] sm:$0xff]
        %v143 = vld [vmem:[%s121 + $0x18] sm:$0xff]
        %v144 = vld [vmem:[%s121 + $0x20] sm:$0xff]
        %v145 = vld [vmem:[%s121 + $0x28] sm:$0xff]
        %v146 = vld [vmem:[%s121 + $0x30] sm:$0xff]
        %v147 = vld [vmem:[%s121 + $0x38] sm:$0xff]
        %148 = vadd.xlane.f32.xlu0 %v140
        %v149 = vpop.xlane.xlu0 %148
        %150 = vadd.xlane.f32.xlu0 %v141
        %v151 = vpop.xlane.xlu0 %150
        %152 = vadd.xlane.f32.xlu0 %v142
        %v153 = vpop.xlane.xlu0 %152
        %154 = vadd.xlane.f32.xlu0 %v143
        %v155 = vpop.xlane.xlu0 %154
        %156 = vadd.xlane.f32.xlu0 %v144
        %v157 = vpop.xlane.xlu0 %156
        %158 = vadd.xlane.f32.xlu0 %v145
        %v159 = vpop.xlane.xlu0 %158
        %160 = vadd.xlane.f32.xlu0 %v146
        %v161 = vpop.xlane.xlu0 %160
        %162 = vadd.xlane.f32.xlu0 %v147
        %v163 = vpop.xlane.xlu0 %162
        %v164 = vmul.f32 %v149, 0.0078125
        %v165 = vmul.f32 %v151, 0.0078125
        %v166 = vmul.f32 %v153, 0.0078125
        %v167 = vmul.f32 %v155, 0.0078125
        %v168 = vmul.f32 %v157, 0.0078125
        %v169 = vmul.f32 %v159, 0.0078125
        %v170 = vmul.f32 %v161, 0.0078125
        %v171 = vmul.f32 %v163, 0.0078125
        %v172 = vlaneseq
        %v173 = vshrl.u32 %v172, 7
        %v174 = vadd.s32 %v173, 8
        %v175 = vadd.s32 %v173, 16
        %v176 = vadd.s32 %v173, 24
        %v177 = vadd.s32 %v173, 32
        %v178 = vadd.s32 %v173, 40
        %v179 = vadd.s32 %v173, 48
        %v180 = vadd.s32 %v173, 56
        %v181 = vlaneseq
        %v182 = vand.u32 %v181, 127
        %v183 = vsub.s32 %v173, %v182
        %v184 = vsub.s32 %v174, %v182
        %v185 = vsub.s32 %v175, %v182
        %v186 = vsub.s32 %v176, %v182
        %v187 = vsub.s32 %v177, %v182
        %v188 = vsub.s32 %v178, %v182
        %v189 = vsub.s32 %v179, %v182
        %v190 = vsub.s32 %v180, %v182
        %v191 = vadd.s32 %v183, 1
        %v192 = vadd.s32 %v184, 1
        %v193 = vadd.s32 %v185, 1
        %v194 = vadd.s32 %v186, 1
        %v195 = vadd.s32 %v187, 1
        %v196 = vadd.s32 %v188, 1
        %v197 = vadd.s32 %v189, 1
        %v198 = vadd.s32 %v190, 1
        %vm199 = vcmp.eq.s32.totalorder %v191, 0
        %vm200 = vcmp.eq.s32.totalorder %v192, 0
        %vm201 = vcmp.eq.s32.totalorder %v193, 0
        %vm202 = vcmp.eq.s32.totalorder %v194, 0
        %vm203 = vcmp.eq.s32.totalorder %v195, 0
        %vm204 = vcmp.eq.s32.totalorder %v196, 0
        %vm205 = vcmp.eq.s32.totalorder %v197, 0
        %vm206 = vcmp.eq.s32.totalorder %v198, 0
        %s207 = sld [smem:[#allocation3]]
        %v208 = vstv %s207
        %v209 = vsel %vm199, %v208, 0.0
        %v210 = vsel %vm200, %v208, 0.0
        %v211 = vsel %vm201, %v208, 0.0
        %v212 = vsel %vm202, %v208, 0.0
        %v213 = vsel %vm203, %v208, 0.0
        %v214 = vsel %vm204, %v208, 0.0
        %v215 = vsel %vm205, %v208, 0.0
        %v216 = vsel %vm206, %v208, 0.0
        %v217 = vadd.f32 %v209, 0.0
        %v218 = vadd.f32 %v210, 0.0
        %v219 = vadd.f32 %v211, 0.0
        %v220 = vadd.f32 %v212, 0.0
        %v221 = vadd.f32 %v213, 0.0
        %v222 = vadd.f32 %v214, 0.0
        %v223 = vadd.f32 %v215, 0.0
        %v224 = vadd.f32 %v216, 0.0
        %vm225 = vcmp.eq.s32.totalorder %v191, 1
        %vm226 = vcmp.eq.s32.totalorder %v192, 1
        %vm227 = vcmp.eq.s32.totalorder %v193, 1
        %vm228 = vcmp.eq.s32.totalorder %v194, 1
        %vm229 = vcmp.eq.s32.totalorder %v195, 1
        %vm230 = vcmp.eq.s32.totalorder %v196, 1
        %vm231 = vcmp.eq.s32.totalorder %v197, 1
        %vm232 = vcmp.eq.s32.totalorder %v198, 1
        %s233 = sld [smem:[#allocation3 + $0x1]]
        %v234 = vstv %s233
        %v235 = vsel %vm225, %v234, 0.0
        %v236 = vsel %vm226, %v234, 0.0
        %v237 = vsel %vm227, %v234, 0.0
        %v238 = vsel %vm228, %v234, 0.0
        %v239 = vsel %vm229, %v234, 0.0
        %v240 = vsel %vm230, %v234, 0.0
        %v241 = vsel %vm231, %v234, 0.0
        %v242 = vsel %vm232, %v234, 0.0
        %v243 = vadd.f32 %v217, %v235
        %v244 = vadd.f32 %v218, %v236
        %v245 = vadd.f32 %v219, %v237
        %v246 = vadd.f32 %v220, %v238
        %v247 = vadd.f32 %v221, %v239
        %v248 = vadd.f32 %v222, %v240
        %v249 = vadd.f32 %v223, %v241
        %v250 = vadd.f32 %v224, %v242
        %vm251 = vcmp.eq.s32.totalorder %v191, 2
        %vm252 = vcmp.eq.s32.totalorder %v192, 2
        %vm253 = vcmp.eq.s32.totalorder %v193, 2
        %vm254 = vcmp.eq.s32.totalorder %v194, 2
        %vm255 = vcmp.eq.s32.totalorder %v195, 2
        %vm256 = vcmp.eq.s32.totalorder %v196, 2
        %vm257 = vcmp.eq.s32.totalorder %v197, 2
        %vm258 = vcmp.eq.s32.totalorder %v198, 2
        %s259 = sld [smem:[#allocation3 + $0x2]]
        %v260 = vstv %s259
        %v261 = vsel %vm251, %v260, 0.0
        %v262 = vsel %vm252, %v260, 0.0
        %v263 = vsel %vm253, %v260, 0.0
        %v264 = vsel %vm254, %v260, 0.0
        %v265 = vsel %vm255, %v260, 0.0
        %v266 = vsel %vm256, %v260, 0.0
        %v267 = vsel %vm257, %v260, 0.0
        %v268 = vsel %vm258, %v260, 0.0
        %v269 = vadd.f32 %v243, %v261
        %v270 = vadd.f32 %v244, %v262
        %v271 = vadd.f32 %v245, %v263
        %v272 = vadd.f32 %v246, %v264
        %v273 = vadd.f32 %v247, %v265
        %v274 = vadd.f32 %v248, %v266
        %v275 = vadd.f32 %v249, %v267
        %v276 = vadd.f32 %v250, %v268
        %v285 = vlaneseq
        %v286 = vshrl.u32 %v285, 7
        %v287 = vsub.s32 %v182, %v286
        %v288 = vrot.slane %v164, %v287
        %v289 = vadd.s32 %v182, 4294967288
        %v290 = vlaneseq
        %v291 = vshrl.u32 %v290, 7
        %v292 = vsub.s32 %v289, %v291
        %v293 = vrot.slane %v165, %v292
        %vm294 = vcmask 130112
        %v295 = vsel %vm294, %v293, %v288
        %v296 = vadd.s32 %v182, 4294967280
        %v297 = vlaneseq
        %v298 = vshrl.u32 %v297, 7
        %v299 = vsub.s32 %v296, %v298
        %v300 = vrot.slane %v166, %v299
        %vm301 = vcmask 195712
        %v302 = vsel %vm301, %v300, %v295
        %v303 = vadd.s32 %v182, 4294967272
        %v304 = vlaneseq
        %v305 = vshrl.u32 %v304, 7
        %v306 = vsub.s32 %v303, %v305
        %v307 = vrot.slane %v167, %v306
        %vm308 = vcmask 261312
        %v309 = vsel %vm308, %v307, %v302
        %v310 = vadd.s32 %v182, 4294967264
        %v311 = vlaneseq
        %v312 = vshrl.u32 %v311, 7
        %v313 = vsub.s32 %v310, %v312
        %v314 = vrot.slane %v168, %v313
        %vm315 = vcmask 326912
        %v316 = vsel %vm315, %v314, %v309
        %v317 = vadd.s32 %v182, 4294967256
        %v318 = vlaneseq
        %v319 = vshrl.u32 %v318, 7
        %v320 = vsub.s32 %v317, %v319
        %v321 = vrot.slane %v169, %v320
        %vm322 = vcmask 392512
        %v323 = vsel %vm322, %v321, %v316
        %v324 = vadd.s32 %v182, 4294967248
        %v325 = vlaneseq
        %v326 = vshrl.u32 %v325, 7
        %v327 = vsub.s32 %v324, %v326
        %v328 = vrot.slane %v170, %v327
        %vm329 = vcmask 458112
        %v330 = vsel %vm329, %v328, %v323
        %v331 = vadd.s32 %v182, 4294967240
        %v332 = vlaneseq
        %v333 = vshrl.u32 %v332, 7
        %v334 = vsub.s32 %v331, %v333
        %v335 = vrot.slane %v171, %v334
        %vm336 = vcmask 523712
        %v337 = vsel %vm336, %v335, %v330
        %vm338 = vcmask 523264
        %v339 = vsel %vm338, %v337, 0
        %341 = vmatprep.subr.mxu0 0.0
        %342 = vmatpush1.msra.mxu0 0.0
        %343 = vmatprep.subr.mxu0 0.0
        %344 = vmatpush1.msra.mxu0 0.0
        %345 = vmatprep.subr.mxu0 0.0
        %346 = vmatpush1.msra.mxu0 0.0
        %347 = vmatprep.subr.mxu0 0.0
        %348 = vmatpush1.msra.mxu0 0.0
        %349 = vmatprep.subr.mxu0 0.0
        %350 = vmatpush1.msra.mxu0 0.0
        %351 = vmatprep.subr.mxu0 0.0
        %352 = vmatpush1.msra.mxu0 0.0
        %353 = vmatprep.subr.mxu0 0.0
        %354 = vmatpush1.msra.mxu0 0.0
        %355 = vmatprep.subr.mxu0 0.0
        %356 = vmatpush1.msra.mxu0 0.0
        %357 = vmatprep.subr.mxu0 0.0
        %358 = vmatpush1.msra.mxu0 %v276
        %359 = vmatprep.subr.mxu0 0.0
        %360 = vmatpush1.msra.mxu0 %v275
        %361 = vmatprep.subr.mxu0 0.0
        %362 = vmatpush1.msra.mxu0 %v274
        %363 = vmatprep.subr.mxu0 0.0
        %364 = vmatpush1.msra.mxu0 %v273
        %365 = vmatprep.subr.mxu0 0.0
        %366 = vmatpush1.msra.mxu0 %v272
        %367 = vmatprep.subr.mxu0 0.0
        %368 = vmatpush1.msra.mxu0 %v271
        %369 = vmatprep.subr.mxu0 0.0
        %370 = vmatpush1.msra.mxu0 %v270
        %371 = vmatprep.subr.mxu0 0.0
        %372 = vmatpush1.msra.mxu0 %v269
        %373 = vmatprep.subr.mxu0 0.0
        %374 = vmatpush2.msra.mxu0 0.0
        %375 = vmatprep.subr.mxu0 0.0
        %376 = vmatpush2.msra.mxu0 0.0
        %377 = vmatprep.subr.mxu0 0.0
        %378 = vmatpush2.msra.mxu0 0.0
        %379 = vmatprep.subr.mxu0 0.0
        %380 = vmatpush2.msra.mxu0 0.0
        %381 = vmatprep.subr.mxu0 0.0
        %382 = vmatpush2.msra.mxu0 0.0
        %383 = vmatprep.subr.mxu0 0.0
        %384 = vmatpush2.msra.mxu0 0.0
        %385 = vmatprep.subr.mxu0 0.0
        %386 = vmatpush2.msra.mxu0 0.0
        %387 = vmatprep.subr.mxu0 0.0
        %388 = vmatpush2.msra.mxu0 0.0
        %389 = vmatprep.subr.mxu0 0.0
        %390 = vmatpush2.msra.mxu0 0.0
        %391 = vmatprep.subr.mxu0 0.0
        %392 = vmatpush2.msra.mxu0 0.0
        %393 = vmatprep.subr.mxu0 0.0
        %394 = vmatpush2.msra.mxu0 0.0
        %395 = vmatprep.subr.mxu0 0.0
        %396 = vmatpush2.msra.mxu0 0.0
        %397 = vmatprep.subr.mxu0 0.0
        %398 = vmatpush2.msra.mxu0 0.0
        %399 = vmatprep.subr.mxu0 0.0
        %400 = vmatpush2.msra.mxu0 0.0
        %401 = vmatprep.subr.mxu0 0.0
        %402 = vmatpush2.msra.mxu0 0.0
        %403 = vmatprep.subr.mxu0 0.0
        %404 = vmatpush2.msra.mxu0 0.0
        %405 = vmatprep.mubr.f32.mxu0 0.0
        %406 = vmatmul.mubr.f32.gmra.mxu0 %v339
        %v407 = vpop.f32.mrf.mxu0
        %v408 = vadd.f32 0.0, %v407
        %v409 = vpop.f32.mrf.mxu0
        %410 = vdwg.mxu0
        %v411 = vsub.f32 0.0, %v408
        %v412 = vmul.f32 %v411, 1.442695
        %v413 = vpow.pop %v412
        %v414 = vadd.f32 %v413, 1.0
        %v415 = vrcp.pop %v414
        %v416 = vmul.f32 1.0, %v415
        %v417 = vlaneseq
        %v418 = vshrl.u32 %v417, 7
        %v419 = vsub.s32 0, %v418
        %v420 = vrot.slane %v416, %v419
        %422 = vbcast.lane.b32.xlu0 %v420, 256
        %v423 = vpop.permute.xlu0 %422
        %s425 = sor.u32 256, 8
        %426 = vbcast.lane.b32.xlu0 %v420, %s425
        %v427 = vpop.permute.xlu0 %426
        %s429 = sor.u32 256, 16
        %430 = vbcast.lane.b32.xlu0 %v420, %s429
        %v431 = vpop.permute.xlu0 %430
        %s433 = sor.u32 256, 24
        %434 = vbcast.lane.b32.xlu0 %v420, %s433
        %v435 = vpop.permute.xlu0 %434
        %s437 = sor.u32 256, 32
        %438 = vbcast.lane.b32.xlu0 %v420, %s437
        %v439 = vpop.permute.xlu0 %438
        %s441 = sor.u32 256, 40
        %442 = vbcast.lane.b32.xlu0 %v420, %s441
        %v443 = vpop.permute.xlu0 %442
        %s445 = sor.u32 256, 48
        %446 = vbcast.lane.b32.xlu0 %v420, %s445
        %v447 = vpop.permute.xlu0 %446
        %s449 = sor.u32 256, 56
        %450 = vbcast.lane.b32.xlu0 %v420, %s449
        %v451 = vpop.permute.xlu0 %450
        %v452 = vmul.f32 %v140, %v423
        %v453 = vmul.f32 %v141, %v427
        %v454 = vmul.f32 %v142, %v431
        %v455 = vmul.f32 %v143, %v435
        %v456 = vmul.f32 %v144, %v439
        %v457 = vmul.f32 %v145, %v443
        %v458 = vmul.f32 %v146, %v447
        %v459 = vmul.f32 %v147, %v451
        %460 = vst [vmem:[%s139] sm:$0xff] %v452
        %461 = vst [vmem:[%s139 + $0x8] sm:$0xff] %v453
        %462 = vst [vmem:[%s139 + $0x10] sm:$0xff] %v454
        %463 = vst [vmem:[%s139 + $0x18] sm:$0xff] %v455
        %464 = vst [vmem:[%s139 + $0x20] sm:$0xff] %v456
        %465 = vst [vmem:[%s139 + $0x28] sm:$0xff] %v457
        %466 = vst [vmem:[%s139 + $0x30] sm:$0xff] %v458
        %467 = vst [vmem:[%s139 + $0x38] sm:$0xff] %v459
        %s468 = sand.u32 %s57, 1
        %s469 = scalar_lea.sflag [#allocation6], %s468
        %s470 = sand.u32 %s57, 1
        %s471 = smul.addr %s470, 64
        %s472 = scalar_lea.vmem [#allocation7], %s471
        // Predicated region
        $region29: #{tpu_custom_call.1} parent=23 // pred_check
          %p473 = pneg %p67
        $region30: #{tpu_custom_call.1} parent=23 // pred_check_branch
          %475 = sbr.rel (%p473) target = $region32
        $region31: #{tpu_custom_call.1} parent=23 // pred_region
          %s477 = ssub.s32 1024, 1024
          %478 = vsyncadd %s469, %s477
          %s479 = smul.addr %s23, 8
          %s480 = smul.addr %s479, 128
          %s481 = scalar_lea.hbm %s2, %s480
          %s482 = sshll.u32 %s472, 4
          %s483 = int_to_ptr.vmem [resolvable:$true] %s482
          %488 = dma.vmem_to_hbm [thread:$0]  %s483, 1024, %s481, %s469, 128, 128, 8
        $region32: #{tpu_custom_call.1} parent=23 // pred_fallthru
          _
      $region24: #{tpu_custom_call.1} parent=5 // pred_fallthru
        _
      %p489 = scmp.le.s32.totalorder 2, %s18
      // Predicated region
      $region33: #{tpu_custom_call.1} parent=5 // pred_check
        %p490 = pneg %p489
      $region34: #{tpu_custom_call.1} parent=5 // pred_check_branch
        %492 = sbr.rel (%p490) target = $region36
      $region35: #{tpu_custom_call.1} parent=5 // pred_region
        %s493 = ssub.s32 %s18, 2
        // Predicated region
        $region37: #{tpu_custom_call.1} parent=35 // pred_check
          %p494 = pneg %p73
        $region38: #{tpu_custom_call.1} parent=35 // pred_check_branch
          %496 = sbr.rel (%p494) target = $region40
        $region39: #{tpu_custom_call.1} parent=35 // pred_region
          %s497 = sand.u32 %s58, 1
          %s498 = scalar_lea.sflag [#allocation6], %s497
          %s499 = sand.u32 %s58, 1
          %s500 = smul.addr %s499, 64
          %s501 = scalar_lea.vmem [#allocation7], %s500
          %502 = dma.done %s498, 1024
        $region40: #{tpu_custom_call.1} parent=35 // pred_fallthru
          _
      $region36: #{tpu_custom_call.1} parent=5 // pred_fallthru
        _
    $region6: #{tpu_custom_call.1} parent=1 // loop_footer
      %s22 = sadd.s32 1, %s18
    $region7: #{tpu_custom_call.1} parent=1 // loop_footer_branch
      %17 = sbr.rel target = $region3
    $region8: #{tpu_custom_call.1} parent=1 // loop_exit
      _
    %503 = vsyncpa [#allocation5], 1
    %s504 = scalar_lea.sflag [#allocation5], 1
    %505 = vsyncpa %s504, 1
    %506 = vsyncpa [#allocation6], 1
    %s507 = scalar_lea.sflag [#allocation6], 1
    %508 = vsyncpa %s507, 1

</llo_original>
